<compile_context>
chip_gen: v7x
topology: tpu7x:2x2x1
jax: 0.10.0
libtpu: 0.0.40
codegen_flags: <defaults>
</compile_context>

<pallas_src>
import jax
import jax.numpy as jnp
import numpy as np
from jax.experimental import pallas as pl
from jax.experimental.pallas import tpu as pltpu

_PACK = 8          # original rows packed per kernel row (8 * 32 = 256 output lanes)
_MASK_FEATS = 10   # "first 10 features all zero" => masked row
_POS_DIM = 7


def _cdiv(a, b):
    return -(-a // b)


def _round_up(a, m):
    return _cdiv(a, m) * m


def _fusion_kernel(x_ref, w_ref, gb_ref, gm_ref, b_ref, s_ref, c_ref,
                   proj_ref, mask_ref, pos_ref):
    # x_ref:    (TR, PACK*D)        f32  packed input rows
    # w_ref:    (PACK*D, PACK*H)    f32  block-diagonal projection weight (resident)
    # gb_ref:   (PACK*D, PACK*H)    bf16 0/1: feature -> its row's H output lanes
    # gm_ref:   (PACK*D, PACK)      bf16 0/1: feature -> its row's mask column
    # b_ref:    (1, PACK*H)         f32  bias tiled PACK times
    # s_ref:    (PACK*D, PACK*7)    f32  0/1 selection of x[..., :4] into pos lanes
    # c_ref:    (1, PACK*7)         f32  [0,0,0,0,0,1,0] tiled PACK times
    # proj_ref: (TR, PACK*H)        f32  lane-dense projection output
    # mask_ref: (TR, PACK)          f32  1.0 where the row is masked
    # pos_ref:  (TR, PACK*7)        f32  packed pos output
    x = x_ref[...]
    xb = (x != 0.0).astype(jnp.bfloat16)                      # exact 0/1 values

    # Projection of 8 packed rows in one MXU matmul (+ bias).
    proj = jnp.dot(x, w_ref[...], preferred_element_type=jnp.float32) + b_ref[...]

    # Nonzero-feature counts (exact small integers): broadcast-over-output-lanes
    # version (gates the projection) and per-row version (mask output).
    nz_lanes = jnp.dot(xb, gb_ref[...], preferred_element_type=jnp.float32)
    nz_rows = jnp.dot(xb, gm_ref[...], preferred_element_type=jnp.float32)

    # Masked rows (all first 10 features exactly zero) produce exactly 0,
    # matching the zero-init + scatter of the PyTorch reference.
    proj_ref[...] = jnp.where(nz_lanes == 0.0, 0.0, proj).astype(proj_ref.dtype)
    mask_ref[...] = (nz_rows == 0.0).astype(mask_ref.dtype)

    # pos = select(x[..., :4]) ++ [0, 1, 0], built with one tiny MXU matmul.
    pos_ref[...] = (jnp.dot(x, s_ref[...], preferred_element_type=jnp.float32)
                    + c_ref[...]).astype(pos_ref.dtype)


def static_fusion_encoder(x, w, b, *, tile_rows=8192):
    """x: [B, P, D] (D >= 10), w: [D, H], b: [H].

    Returns (x_result [B,P,H] f32, mask_p [B,P] bool, pos [B,P,7] f32).
    """
    B, P, D = x.shape
    H = w.shape[1]
    N = B * P

    # ---- row packing (pad only to a multiple of _PACK; usually a no-op) ----
    n_pack = _cdiv(N, _PACK)            # packed kernel rows
    n_rows_pad = n_pack * _PACK
    x_flat = x.reshape(N, D).astype(jnp.float32)
    if n_rows_pad != N:
        # < _PACK zero rows; they come out masked/zero and are sliced off below.
        x_flat = jnp.pad(x_flat, ((0, n_rows_pad - N), (0, 0)))
    x_view = x_flat.reshape(n_pack, _PACK * D)   # contiguous -> free reshape

    # ---- packed-row tile selection ----------------------------------------
    tr = max(8, (tile_rows // _PACK) // 8 * 8)
    tr = min(tr, _round_up(n_pack, 8))           # don't overshoot tiny inputs
    if n_pack > 16:
        # Guarantee >= 2 grid steps so v7x's two TensorCores both get work.
        tr = min(tr, max(8, _round_up(_cdiv(n_pack, 2), 8)))
    grid = (_cdiv(n_pack, tr),)

    # ---- resident constants -------------------------------------------------
    w32 = w.astype(jnp.float32)
    w_bd = jnp.kron(jnp.eye(_PACK, dtype=jnp.float32), w32)            # (8D, 8H)
    b_tiled = jnp.tile(b.astype(jnp.float32), _PACK).reshape(1, _PACK * H)

    nmask = min(_MASK_FEATS, D)
    cols = np.arange(_PACK * D)
    # feature -> its row's H output lanes (for gating the projection)
    lanes_h = np.arange(_PACK * H)
    gb_np = ((cols[:, None] // D) == (lanes_h[None, :] // H)) & \
            ((cols[:, None] % D) < nmask)
    gb = jnp.asarray(gb_np, dtype=jnp.bfloat16)
    # feature -> its row's mask column (per-row nonzero count)
    rows_p = np.arange(_PACK)
    gm_np = ((cols[:, None] // D) == rows_p[None, :]) & \
            ((cols[:, None] % D) < nmask)
    gm = jnp.asarray(gm_np, dtype=jnp.bfloat16)
    # pos selection: output lane p*7+j picks input col p*D+j for j < 4
    lanes_pos = np.arange(_PACK * _POS_DIM)
    s_np = ((cols[:, None] // D) == (lanes_pos[None, :] // _POS_DIM)) & \
           ((lanes_pos[None, :] % _POS_DIM) < 4) & \
           ((cols[:, None] % D) == (lanes_pos[None, :] % _POS_DIM))
    s_sel = jnp.asarray(s_np, dtype=jnp.float32)
    c_np = np.zeros((1, _PACK * _POS_DIM), np.float32)
    c_np[0, np.arange(_PACK) * _POS_DIM + 5] = 1.0                     # middle[-2] = 1
    c_mid = jnp.asarray(c_np)

    proj_v, mask_v, pos_v = pl.pallas_call(
        _fusion_kernel,
        out_shape=(
            jax.ShapeDtypeStruct((n_pack, _PACK * H), jnp.float32),
            jax.ShapeDtypeStruct((n_pack, _PACK), jnp.float32),
            jax.ShapeDtypeStruct((n_pack, _PACK * _POS_DIM), jnp.float32),
        ),
        grid_spec=pltpu.PrefetchScalarGridSpec(
            num_scalar_prefetch=0,
            grid=grid,
            in_specs=[
                pl.BlockSpec((tr, _PACK * D), lambda i: (i, 0)),             # packed rows
                pl.BlockSpec((_PACK * D, _PACK * H), lambda i: (0, 0)),      # weight
                pl.BlockSpec((_PACK * D, _PACK * H), lambda i: (0, 0)),      # lane indicator
                pl.BlockSpec((_PACK * D, _PACK), lambda i: (0, 0)),          # row indicator
                pl.BlockSpec((1, _PACK * H), lambda i: (0, 0)),              # bias
                pl.BlockSpec((_PACK * D, _PACK * _POS_DIM), lambda i: (0, 0)),  # pos select
                pl.BlockSpec((1, _PACK * _POS_DIM), lambda i: (0, 0)),       # pos constant
            ],
            out_specs=[
                pl.BlockSpec((tr, _PACK * H), lambda i: (i, 0)),             # projection
                pl.BlockSpec((tr, _PACK), lambda i: (i, 0)),                 # mask
                pl.BlockSpec((tr, _PACK * _POS_DIM), lambda i: (i, 0)),      # pos
            ],
        ),
        compiler_params=pltpu.CompilerParams(
            dimension_semantics=("parallel",)),
    )(x_view, w_bd, gb, gm, b_tiled, s_sel, c_mid)

    # Packed -> per-row views are free reshapes of contiguous data; the [:N]
    # slices are no-ops whenever B*P is a multiple of _PACK.
    x_result = proj_v.reshape(n_rows_pad, H)[:N].reshape(B, P, H)
    mask_p = (mask_v.reshape(n_rows_pad)[:N] != 0.0).reshape(B, P)
    pos = pos_v.reshape(n_rows_pad, _POS_DIM)[:N].reshape(B, P, _POS_DIM)
    return x_result, mask_p, pos


def _reference(x, w, b):
    B, P, D = x.shape
    x_flat = x.reshape(-1, D)
    mask_p = jnp.sum(x[..., :10] != 0, axis=-1) == 0
    proj = x_flat @ w + b
    x_result = jnp.where(mask_p.reshape(-1, 1), 0.0, proj).reshape(B, P, -1)
    first_part = x[:, :, :4]
    middle = jnp.zeros((B, P, 3), dtype=x.dtype).at[..., 1].set(1.0)
    pos = jnp.concatenate([first_part, middle], axis=-1)
    return x_result, mask_p, pos


if __name__ == "__main__":
    # Small shapes consistent with the module: B=2 batches, P=8 static
    # objects, D=10 features per object, hidden_dim H=32.
    B, P, D, H = 2, 8, 10, 32
    key = jax.random.PRNGKey(0)
    kx, kw, kb = jax.random.split(key, 3)

    x = jax.random.normal(kx, (B, P, D), dtype=jnp.float32)
    # Zero out a few rows so the "all first-10 features are zero" mask fires.
    x = x.at[0, 3, :].set(0.0)
    x = x.at[1, 0, :].set(0.0)
    x = x.at[1, 5, :].set(0.0)

    # Deterministic synthetic Linear(D -> H) parameters (projection).
    w = jax.random.normal(kw, (D, H), dtype=jnp.float32) * (1.0 / np.sqrt(D))
    b = jax.random.normal(kb, (H,), dtype=jnp.float32) * 0.01

    fn = jax.jit(lambda x, w, b: static_fusion_encoder(x, w, b))
    x_result, mask_p, pos = fn(x, w, b)
    jax.block_until_ready((x_result, mask_p, pos))

    ref_res, ref_mask, ref_pos = _reference(x, w, b)
    np.testing.assert_allclose(np.asarray(x_result), np.asarray(ref_res),
                               rtol=1e-5, atol=1e-5)
    np.testing.assert_array_equal(np.asarray(mask_p), np.asarray(ref_mask))
    np.testing.assert_allclose(np.asarray(pos), np.asarray(ref_pos),
                               rtol=1e-6, atol=1e-6)

    print("KERNEL_OK")
</pallas_src>

<mosaic_0001>
module attributes {stable_mosaic.version = 11 : i64} {
  func.func @_fusion_kernel(%arg0: i32, %arg1: memref<8x80xf32, #tpu.memory_space<vmem>>, %arg2: memref<80x256xf32, #tpu.memory_space<vmem>>, %arg3: memref<80x256xbf16, #tpu.memory_space<vmem>>, %arg4: memref<80x8xbf16, #tpu.memory_space<vmem>>, %arg5: memref<1x256xf32, #tpu.memory_space<vmem>>, %arg6: memref<80x56xf32, #tpu.memory_space<vmem>>, %arg7: memref<1x56xf32, #tpu.memory_space<vmem>>, %arg8: memref<8x256xf32, #tpu.memory_space<vmem>>, %arg9: memref<8x8xf32, #tpu.memory_space<vmem>>, %arg10: memref<8x56xf32, #tpu.memory_space<vmem>>) attributes {dimension_semantics = [#tpu.dimension_semantics<parallel>], iteration_bounds = array<i64: 1>, scalar_prefetch = 0 : i64, scratch_operands = 0 : i64, tpu.core_type = #tpu.core_type<tc>, window_params = [{transform_indices = @transform_0, window_bounds = array<i64: 8, 80>}, {pipeline_mode = #tpu.pipeline_mode<synchronous>, transform_indices = @transform_1, window_bounds = array<i64: 80, 256>}, {pipeline_mode = #tpu.pipeline_mode<synchronous>, transform_indices = @transform_2, window_bounds = array<i64: 80, 256>}, {pipeline_mode = #tpu.pipeline_mode<synchronous>, transform_indices = @transform_3, window_bounds = array<i64: 80, 8>}, {pipeline_mode = #tpu.pipeline_mode<synchronous>, transform_indices = @transform_4, window_bounds = array<i64: 1, 256>}, {pipeline_mode = #tpu.pipeline_mode<synchronous>, transform_indices = @transform_5, window_bounds = array<i64: 80, 56>}, {pipeline_mode = #tpu.pipeline_mode<synchronous>, transform_indices = @transform_6, window_bounds = array<i64: 1, 56>}, {transform_indices = @transform_7, window_bounds = array<i64: 8, 256>}, {transform_indices = @transform_8, window_bounds = array<i64: 8, 8>}, {transform_indices = @transform_9, window_bounds = array<i64: 8, 56>}]} {
    %c0 = arith.constant 0 : index
    %c0_0 = arith.constant 0 : index
    %0 = vector.load %arg1[%c0, %c0_0] : memref<8x80xf32, #tpu.memory_space<vmem>>, vector<8x80xf32>
    %cst = arith.constant 0.000000e+00 : f32
    %1 = vector.broadcast %cst : f32 to vector<8x80xf32>
    %2 = arith.cmpf one, %0, %1 : vector<8x80xf32>
    %3 = arith.extui %2 : vector<8x80xi1> to vector<8x80xi32>
    %4 = arith.sitofp %3 : vector<8x80xi32> to vector<8x80xf32>
    %5 = arith.truncf %4 : vector<8x80xf32> to vector<8x80xbf16>
    %c0_1 = arith.constant 0 : index
    %c0_2 = arith.constant 0 : index
    %6 = vector.load %arg2[%c0_1, %c0_2] : memref<80x256xf32, #tpu.memory_space<vmem>>, vector<80x256xf32>
    %cst_3 = arith.constant dense<0.000000e+00> : vector<8x256xf32>
    %7 = tpu.matmul %0, %6, %cst_3 {dimension_numbers = #tpu.dot_dimension_numbers<[1], [0], [0], [1], [0, 0, 1, 1], [], []>} : vector<8x80xf32>, vector<80x256xf32>, vector<8x256xf32> -> vector<8x256xf32>
    %c0_4 = arith.constant 0 : index
    %c0_5 = arith.constant 0 : index
    %8 = vector.load %arg5[%c0_4, %c0_5] : memref<1x256xf32, #tpu.memory_space<vmem>>, vector<1x256xf32>
    %9 = vector.broadcast %8 : vector<1x256xf32> to vector<8x256xf32>
    %10 = arith.addf %7, %9 : vector<8x256xf32>
    %c0_6 = arith.constant 0 : index
    %c0_7 = arith.constant 0 : index
    %11 = vector.load %arg3[%c0_6, %c0_7] : memref<80x256xbf16, #tpu.memory_space<vmem>>, vector<80x256xbf16>
    %cst_8 = arith.constant dense<0.000000e+00> : vector<8x256xf32>
    %12 = tpu.matmul %5, %11, %cst_8 {dimension_numbers = #tpu.dot_dimension_numbers<[1], [0], [0], [1], [0, 0, 1, 1], [], []>} : vector<8x80xbf16>, vector<80x256xbf16>, vector<8x256xf32> -> vector<8x256xf32>
    %c0_9 = arith.constant 0 : index
    %c0_10 = arith.constant 0 : index
    %13 = vector.load %arg4[%c0_9, %c0_10] : memref<80x8xbf16, #tpu.memory_space<vmem>>, vector<80x8xbf16>
    %cst_11 = arith.constant dense<0.000000e+00> : vector<8x8xf32>
    %14 = tpu.matmul %5, %13, %cst_11 {dimension_numbers = #tpu.dot_dimension_numbers<[1], [0], [0], [1], [0, 0, 1, 1], [], []>} : vector<8x80xbf16>, vector<80x8xbf16>, vector<8x8xf32> -> vector<8x8xf32>
    %cst_12 = arith.constant 0.000000e+00 : f32
    %15 = vector.broadcast %cst_12 : f32 to vector<8x256xf32>
    %16 = arith.cmpf oeq, %12, %15 : vector<8x256xf32>
    %cst_13 = arith.constant 0.000000e+00 : f32
    %17 = vector.broadcast %cst_13 : f32 to vector<8x256xf32>
    %18 = arith.select %16, %17, %10 : vector<8x256xi1>, vector<8x256xf32>
    %c0_14 = arith.constant 0 : index
    %c0_15 = arith.constant 0 : index
    %19 = vector.load %arg8[%c0_14, %c0_15] : memref<8x256xf32, #tpu.memory_space<vmem>>, vector<8x256xf32>
    tpu.vector_store %arg8[%c0_14, %c0_15], %18 {strides = array<i32>} : memref<8x256xf32, #tpu.memory_space<vmem>>, vector<8x256xf32>,
    %cst_16 = arith.constant 0.000000e+00 : f32
    %20 = vector.broadcast %cst_16 : f32 to vector<8x8xf32>
    %21 = arith.cmpf oeq, %14, %20 : vector<8x8xf32>
    %22 = arith.extui %21 : vector<8x8xi1> to vector<8x8xi32>
    %23 = arith.sitofp %22 : vector<8x8xi32> to vector<8x8xf32>
    %c0_17 = arith.constant 0 : index
    %c0_18 = arith.constant 0 : index
    %24 = vector.load %arg9[%c0_17, %c0_18] : memref<8x8xf32, #tpu.memory_space<vmem>>, vector<8x8xf32>
    tpu.vector_store %arg9[%c0_17, %c0_18], %23 {strides = array<i32>} : memref<8x8xf32, #tpu.memory_space<vmem>>, vector<8x8xf32>,
    %c0_19 = arith.constant 0 : index
    %c0_20 = arith.constant 0 : index
    %25 = vector.load %arg6[%c0_19, %c0_20] : memref<80x56xf32, #tpu.memory_space<vmem>>, vector<80x56xf32>
    %cst_21 = arith.constant dense<0.000000e+00> : vector<8x56xf32>
    %26 = tpu.matmul %0, %25, %cst_21 {dimension_numbers = #tpu.dot_dimension_numbers<[1], [0], [0], [1], [0, 0, 1, 1], [], []>} : vector<8x80xf32>, vector<80x56xf32>, vector<8x56xf32> -> vector<8x56xf32>
    %c0_22 = arith.constant 0 : index
    %c0_23 = arith.constant 0 : index
    %27 = vector.load %arg7[%c0_22, %c0_23] : memref<1x56xf32, #tpu.memory_space<vmem>>, vector<1x56xf32>
    %28 = vector.broadcast %27 : vector<1x56xf32> to vector<8x56xf32>
    %29 = arith.addf %26, %28 : vector<8x56xf32>
    %c0_24 = arith.constant 0 : index
    %c0_25 = arith.constant 0 : index
    %30 = vector.load %arg10[%c0_24, %c0_25] : memref<8x56xf32, #tpu.memory_space<vmem>>, vector<8x56xf32>
    tpu.vector_store %arg10[%c0_24, %c0_25], %29 {strides = array<i32>} : memref<8x56xf32, #tpu.memory_space<vmem>>, vector<8x56xf32>,
    return
  }
  func.func @transform_0(%arg0: i32) -> (i32, i32) {
    %c0_i32 = arith.constant 0 : i32
    %c0_i32_0 = arith.constant 0 : i32
    return %arg0, %c0_i32 : i32, i32
  }
  func.func @transform_1(%arg0: i32) -> (i32, i32) {
    %c0_i32 = arith.constant 0 : i32
    %c0_i32_0 = arith.constant 0 : i32
    %c0_i32_1 = arith.constant 0 : i32
    return %c0_i32, %c0_i32_0 : i32, i32
  }
  func.func @transform_2(%arg0: i32) -> (i32, i32) {
    %c0_i32 = arith.constant 0 : i32
    %c0_i32_0 = arith.constant 0 : i32
    %c0_i32_1 = arith.constant 0 : i32
    return %c0_i32, %c0_i32_0 : i32, i32
  }
  func.func @transform_3(%arg0: i32) -> (i32, i32) {
    %c0_i32 = arith.constant 0 : i32
    %c0_i32_0 = arith.constant 0 : i32
    %c0_i32_1 = arith.constant 0 : i32
    return %c0_i32, %c0_i32_0 : i32, i32
  }
  func.func @transform_4(%arg0: i32) -> (i32, i32) {
    %c0_i32 = arith.constant 0 : i32
    %c0_i32_0 = arith.constant 0 : i32
    %c0_i32_1 = arith.constant 0 : i32
    return %c0_i32, %c0_i32_0 : i32, i32
  }
  func.func @transform_5(%arg0: i32) -> (i32, i32) {
    %c0_i32 = arith.constant 0 : i32
    %c0_i32_0 = arith.constant 0 : i32
    %c0_i32_1 = arith.constant 0 : i32
    return %c0_i32, %c0_i32_0 : i32, i32
  }
  func.func @transform_6(%arg0: i32) -> (i32, i32) {
    %c0_i32 = arith.constant 0 : i32
    %c0_i32_0 = arith.constant 0 : i32
    %c0_i32_1 = arith.constant 0 : i32
    return %c0_i32, %c0_i32_0 : i32, i32
  }
  func.func @transform_7(%arg0: i32) -> (i32, i32) {
    %c0_i32 = arith.constant 0 : i32
    %c0_i32_0 = arith.constant 0 : i32
    return %arg0, %c0_i32 : i32, i32
  }
  func.func @transform_8(%arg0: i32) -> (i32, i32) {
    %c0_i32 = arith.constant 0 : i32
    %c0_i32_0 = arith.constant 0 : i32
    return %arg0, %c0_i32 : i32, i32
  }
  func.func @transform_9(%arg0: i32) -> (i32, i32) {
    %c0_i32 = arith.constant 0 : i32
    %c0_i32_0 = arith.constant 0 : i32
    return %arg0, %c0_i32 : i32, i32
  }
}

</mosaic_0001>

<llo_original>
// kernel: tile.8
$region0: #{tile.8}
  #allocation0 [shape = 's32[1]{0}', space=sflag, size = 0x4, scoped, tag = 'scoped memory for tile.8']
  %s0 = inlined_call_operand.vmem [shape: f32[32], index: 0, kind: input, shape index: {}]
  %s1 = inlined_call_operand.vmem [shape: f32[8,32], index: 1, kind: output, shape index: {}]
  // Predicated region
  $region2: #{tile.8} parent=0 // pred_check
    _
  $region3: #{tile.8} parent=0 // pred_check_branch
    %3 = sbr.rel (0) target = $region5
  $region4: #{tile.8} parent=0 // pred_region
    _
  $region5: #{tile.8} parent=0 // pred_fallthru
    _
  %v4 = vld [vmem:[%s0] ss:$0 sm:$0xff]
  %5 = vst [vmem:[%s1] sm:$0xff] %v4

// kernel: tile.9
$region0: #{tile.9}
  %s0 = inlined_call_operand.vmem [shape: f32[8,32], index: 0, kind: input, shape index: {}]
  %s1 = inlined_call_operand.vmem [shape: f32[1,256], index: 1, kind: output, shape index: {}]
  $region1: #{tile.9} parent=0
    #allocation0 [shape = 'u8[8192]{0}', space=vmem, size = 0x2000, scoped, tag = 'scoped mem for output reshape']
    %s2 = smov 3
    %v3 = vld [vmem:[%s0] ss:$4 sm:%s2]
    %vm4 = vcmask 261120
    %5 = vst.msk [vmem:[#allocation0] ss:$8 sm:$0x3] %vm4, %v3
    %s6 = scalar_lea.vmem %s0, 3
    %s7 = smov 3
    %v8 = vld [vmem:[%s6] ss:$4 sm:%s7]
    %9 = vrot.lane.b32.xlu0 %v8, 96
    %v10 = vpop.permute.xlu0 %9
    %vm11 = vcmask 1048320
    %12 = vst.msk [vmem:[#allocation0] ss:$8 sm:$0x3] %vm11, %v10
    %s13 = scalar_lea.vmem %s0, 2
    %s14 = smov 3
    %v15 = vld [vmem:[%s13] ss:$4 sm:%s14]
    %16 = vrot.lane.b32.xlu0 %v15, 64
    %v17 = vpop.permute.xlu0 %16
    %vm18 = vcmask 785920
    %19 = vst.msk [vmem:[#allocation0] ss:$8 sm:$0x3] %vm18, %v17
    %s20 = scalar_lea.vmem %s0, 1
    %s21 = smov 3
    %v22 = vld [vmem:[%s20] ss:$4 sm:%s21]
    %23 = vrot.lane.b32.xlu0 %v22, 32
    %v24 = vpop.permute.xlu0 %23
    %vm25 = vcmask 523520
    %26 = vst.msk [vmem:[#allocation0] ss:$8 sm:$0x3] %vm25, %v24
    %s28 = sshllo.u32 0, 1
    %v30 = vld [vmem:[#allocation0] sm:%s28]
    %s31 = sshllo.u32 0, 1
    %32 = vst [vmem:[%s1] sm:%s31] %v30
    %s33 = scalar_lea.vmem [#allocation0], 8
    %v34 = vld [vmem:[%s33] sm:%s28]
    %s35 = sshllo.u32 0, 1
    %s36 = scalar_lea.vmem %s1, 1
    %37 = vst [vmem:[%s36] sm:%s35] %v34

// kernel: _lambda_.1
$region0: #{_lambda_.1}
  #allocation0 [shape = 'u32[]', space=smem, size = 0x4, offset = 0x4, fixed_abs, tag = 'smem constant byte address 0x4 - core index']
  #allocation1 [shape = 'u32[144,128]{1,0:T(1,128)}', space=vmem, size = 0x12000, scoped, tag = 'internal scratch']
  %s0 = inlined_call_operand.vmem [shape: f32[2,80], index: 0, kind: input, shape index: {}]
  %s1 = inlined_call_operand.vmem [shape: f32[80,256], index: 1, kind: input, shape index: {}]
  %s2 = inlined_call_operand.vmem [shape: bf16[80,256], index: 2, kind: input, shape index: {}]
  %s3 = inlined_call_operand.vmem [shape: bf16[80,8], index: 3, kind: input, shape index: {}]
  %s4 = inlined_call_operand.vmem [shape: f32[1,256], index: 4, kind: input, shape index: {}]
  %s5 = inlined_call_operand.vmem [shape: f32[80,56], index: 5, kind: input, shape index: {}]
  %s6 = inlined_call_operand.vmem [shape: f32[1,56], index: 6, kind: input, shape index: {}]
  %s7 = inlined_call_operand.vmem [shape: f32[2,256], index: 7, kind: output, shape index: {0}]
  %s8 = inlined_call_operand.vmem [shape: f32[2,8], index: 8, kind: output, shape index: {1}]
  %s9 = inlined_call_operand.vmem [shape: f32[2,56], index: 9, kind: output, shape index: {2}]
  %10 = xla_tuple %s7, %s8, %s9
  %s11 = sld [smem:[#allocation0]]
  $region144: #{_lambda_.1} parent=0
    _
  %s13 = ssub.s32 1, %s11
  %s14 = scalar_select 0, %s13, %s11
  $region1: #{_lambda_.1} parent=0
    #allocation2 [shape = 'u8[8192]{0}', space=vmem, size = 0x2000, scoped, tag = 'output window, operand 0, single buffered']
    #allocation3 [shape = 'u8[4096]{0}', space=vmem, size = 0x1000, scoped, tag = 'output window, operand 1, single buffered']
    #allocation4 [shape = 'u8[4096]{0}', space=vmem, size = 0x1000, scoped, tag = 'output window, operand 2, single buffered']
    // Predicated region
    $region2: #{_lambda_.1} parent=1 // pred_check
      _
    $region3: #{_lambda_.1} parent=1 // pred_check_branch
      %16 = sbr.rel (0) target = $region5
    $region4: #{_lambda_.1} parent=1 // pred_region
      _
    $region5: #{_lambda_.1} parent=1 // pred_fallthru
      _
    // Predicated region
    $region6: #{_lambda_.1} parent=1 // pred_check
      _
    $region7: #{_lambda_.1} parent=1 // pred_check_branch
      %18 = sbr.rel (0) target = $region9
    $region8: #{_lambda_.1} parent=1 // pred_region
      _
    $region9: #{_lambda_.1} parent=1 // pred_fallthru
      _
    // Predicated region
    $region10: #{_lambda_.1} parent=1 // pred_check
      _
    $region11: #{_lambda_.1} parent=1 // pred_check_branch
      %20 = sbr.rel (0) target = $region13
    $region12: #{_lambda_.1} parent=1 // pred_region
      _
    $region13: #{_lambda_.1} parent=1 // pred_fallthru
      _
    // Predicated region
    $region14: #{_lambda_.1} parent=1 // pred_check
      _
    $region15: #{_lambda_.1} parent=1 // pred_check_branch
      %22 = sbr.rel (0) target = $region17
    $region16: #{_lambda_.1} parent=1 // pred_region
      _
    $region17: #{_lambda_.1} parent=1 // pred_fallthru
      _
    // Predicated region
    $region18: #{_lambda_.1} parent=1 // pred_check
      _
    $region19: #{_lambda_.1} parent=1 // pred_check_branch
      %24 = sbr.rel (0) target = $region21
    $region20: #{_lambda_.1} parent=1 // pred_region
      _
    $region21: #{_lambda_.1} parent=1 // pred_fallthru
      _
    // Predicated region
    $region22: #{_lambda_.1} parent=1 // pred_check
      _
    $region23: #{_lambda_.1} parent=1 // pred_check_branch
      %26 = sbr.rel (0) target = $region25
    $region24: #{_lambda_.1} parent=1 // pred_region
      _
    $region25: #{_lambda_.1} parent=1 // pred_fallthru
      _
    // Predicated region
    $region26: #{_lambda_.1} parent=1 // pred_check
      _
    $region27: #{_lambda_.1} parent=1 // pred_check_branch
      %28 = sbr.rel (0) target = $region29
    $region28: #{_lambda_.1} parent=1 // pred_region
      _
    $region29: #{_lambda_.1} parent=1 // pred_fallthru
      _
    %v30 = vld [vmem:[%s0] sm:$0xff]
    %vm31 = vcmp.ne.f32.partialorder %v30, 0.0
    %v32 = vsel %vm31, 1, 0
    %v33 = vcvt.s32.f32 %v32
    %v34 = vpack.c.bf16 %v33, %v33
    %v35 = vld [vmem:[%s1] sm:$0xff]
    %v36 = vld [vmem:[%s1 + $0x8] sm:$0xff]
    %v37 = vld [vmem:[%s1 + $0x10] sm:$0xff]
    %v38 = vld [vmem:[%s1 + $0x18] sm:$0xff]
    %v39 = vld [vmem:[%s1 + $0x20] sm:$0xff]
    %v40 = vld [vmem:[%s1 + $0x28] sm:$0xff]
    %v41 = vld [vmem:[%s1 + $0x30] sm:$0xff]
    %v42 = vld [vmem:[%s1 + $0x38] sm:$0xff]
    %v43 = vld [vmem:[%s1 + $0x40] sm:$0xff]
    %v44 = vld [vmem:[%s1 + $0x48] sm:$0xff]
    %v45 = vld [vmem:[%s1 + $0x50] sm:$0xff]
    %v46 = vld [vmem:[%s1 + $0x58] sm:$0xff]
    %v47 = vld [vmem:[%s1 + $0x60] sm:$0xff]
    %v48 = vld [vmem:[%s1 + $0x68] sm:$0xff]
    %v49 = vld [vmem:[%s1 + $0x70] sm:$0xff]
    %v50 = vld [vmem:[%s1 + $0x78] sm:$0xff]
    %v51 = vld [vmem:[%s1 + $0x80] sm:$0xff]
    %v52 = vld [vmem:[%s1 + $0x88] sm:$0xff]
    %v53 = vld [vmem:[%s1 + $0x90] sm:$0xff]
    %v54 = vld [vmem:[%s1 + $0x98] sm:$0xff]
    %v55 = vld [vmem:[%s4] sm:$0x3]
    %v57 = vlaneseq
    %v58 = vshrl.u32 %v57, 7
    %v59 = vsub.s32 0, %v58
    %v60 = vrot.slane %v55, %v59
    %v61 = vlaneseq
    %v62 = vshrl.u32 %v61, 7
    %v63 = vsub.s32 1, %v62
    %v64 = vrot.slane %v55, %v63
    %vm67 = vcmask 654336
    %v69 = vsel %vm67, %v30, 0
    %71 = vmatprep.subr.mxu0 %v36
    %72 = vmatpush1.msra.mxu0 %v35
    %73 = vmatprep.subr.mxu0 %v38
    %74 = vmatpush1.msra.mxu0 %v37
    %75 = vmatprep.subr.mxu0 %v40
    %76 = vmatpush1.msra.mxu0 %v39
    %77 = vmatprep.subr.mxu0 %v42
    %78 = vmatpush1.msra.mxu0 %v41
    %79 = vmatprep.subr.mxu0 %v44
    %80 = vmatpush1.msra.mxu0 %v43
    %81 = vmatprep.subr.mxu0 %v46
    %82 = vmatpush1.msra.mxu0 %v45
    %83 = vmatprep.subr.mxu0 %v48
    %84 = vmatpush1.msra.mxu0 %v47
    %85 = vmatprep.subr.mxu0 %v50
    %86 = vmatpush1.msra.mxu0 %v49
    %87 = vmatprep.subr.mxu0 %v52
    %88 = vmatpush1.msra.mxu0 %v51
    %89 = vmatprep.subr.mxu0 %v54
    %90 = vmatpush1.msra.mxu0 %v53
    %91 = vmatprep.subr.mxu0 0.0
    %92 = vmatpush1.msra.mxu0 0.0
    %93 = vmatprep.subr.mxu0 0.0
    %94 = vmatpush1.msra.mxu0 0.0
    %95 = vmatprep.subr.mxu0 0.0
    %96 = vmatpush1.msra.mxu0 0.0
    %97 = vmatprep.subr.mxu0 0.0
    %98 = vmatpush1.msra.mxu0 0.0
    %99 = vmatprep.subr.mxu0 0.0
    %100 = vmatpush1.msra.mxu0 0.0
    %101 = vmatprep.subr.mxu0 0.0
    %102 = vmatpush1.msra.mxu0 0.0
    %103 = vmatprep.subr.mxu0 0.0
    %104 = vmatpush1.msra.mxu0 0.0
    %105 = vmatprep.subr.mxu0 0.0
    %106 = vmatpush1.msra.mxu0 0.0
    %107 = vmatprep.subr.mxu0 0.0
    %108 = vmatpush1.msra.mxu0 0.0
    %109 = vmatprep.subr.mxu0 0.0
    %110 = vmatpush1.msra.mxu0 0.0
    %111 = vmatprep.subr.mxu0 0.0
    %112 = vmatpush1.msra.mxu0 0.0
    %113 = vmatprep.subr.mxu0 0.0
    %114 = vmatpush1.msra.mxu0 0.0
    %115 = vmatprep.subr.mxu0 0.0
    %116 = vmatpush1.msra.mxu0 0.0
    %117 = vmatprep.subr.mxu0 0.0
    %118 = vmatpush1.msra.mxu0 0.0
    %119 = vmatprep.subr.mxu0 0.0
    %120 = vmatpush1.msra.mxu0 0.0
    %121 = vmatprep.subr.mxu0 0.0
    %122 = vmatpush1.msra.mxu0 0.0
    %123 = vmatprep.subr.mxu0 0.0
    %124 = vmatpush1.msra.mxu0 0.0
    %125 = vmatprep.subr.mxu0 0.0
    %126 = vmatpush1.msra.mxu0 0.0
    %127 = vmatprep.subr.mxu0 0.0
    %128 = vmatpush1.msra.mxu0 0.0
    %129 = vmatprep.subr.mxu0 0.0
    %130 = vmatpush1.msra.mxu0 0.0
    %131 = vmatprep.subr.mxu0 0.0
    %132 = vmatpush1.msra.mxu0 0.0
    %133 = vmatprep.subr.mxu0 0.0
    %134 = vmatpush1.msra.mxu0 0.0
    %135 = vmatprep.mubr.f32.mxu0 0.0
    %136 = vmatmul.mubr.f32.gmra.mrb[0].mxu0 %v69
    %v137 = vpop.f32.mrb[0].mxu0
    %v138 = vadd.f32 %v60, %v137
    %v139 = vpop.f32.mrb[0].mxu0
    %v140 = vadd.f32 %v64, %v139
    %141 = vdwg.mxu0
    %v142 = vld [vmem:[%s2] sm:$0xff]
    %v143 = vld [vmem:[%s2 + $0x8] sm:$0xff]
    %v144 = vld [vmem:[%s2 + $0x10] sm:$0xff]
    %v145 = vld [vmem:[%s2 + $0x18] sm:$0xff]
    %v146 = vld [vmem:[%s2 + $0x20] sm:$0xff]
    %v147 = vld [vmem:[%s2 + $0x28] sm:$0xff]
    %v148 = vld [vmem:[%s2 + $0x30] sm:$0xff]
    %v149 = vld [vmem:[%s2 + $0x38] sm:$0xff]
    %v150 = vld [vmem:[%s2 + $0x40] sm:$0xff]
    %v151 = vld [vmem:[%s2 + $0x48] sm:$0xff]
    %v162 = vunpack.c.l.b16 %v142
    %v163 = vunpack.c.h.b16 %v142
    %v164 = vunpack.c.l.b16 %v143
    %v165 = vunpack.c.h.b16 %v143
    %v166 = vunpack.c.l.b16 %v144
    %v167 = vunpack.c.h.b16 %v144
    %v168 = vunpack.c.l.b16 %v145
    %v169 = vunpack.c.h.b16 %v145
    %v170 = vunpack.c.l.b16 %v146
    %v171 = vunpack.c.h.b16 %v146
    %v172 = vunpack.c.l.b16 %v147
    %v173 = vunpack.c.h.b16 %v147
    %v174 = vunpack.c.l.b16 %v148
    %v175 = vunpack.c.h.b16 %v148
    %v176 = vunpack.c.l.b16 %v149
    %v177 = vunpack.c.h.b16 %v149
    %v178 = vunpack.c.l.b16 %v150
    %v179 = vunpack.c.h.b16 %v150
    %v180 = vunpack.c.l.b16 %v151
    %v181 = vunpack.c.h.b16 %v151
    %v182 = vpack.c.b16 %v164, %v162
    %v183 = vpack.c.b16 %v165, %v163
    %v184 = vpack.c.b16 %v168, %v166
    %v185 = vpack.c.b16 %v169, %v167
    %v186 = vpack.c.b16 %v172, %v170
    %v187 = vpack.c.b16 %v173, %v171
    %v188 = vpack.c.b16 %v176, %v174
    %v189 = vpack.c.b16 %v177, %v175
    %v190 = vpack.c.b16 %v180, %v178
    %v191 = vpack.c.b16 %v181, %v179
    %v203 = vsel %vm67, %v34, 0
    %205 = vmatprep.subr.bf16.mxu0 %v183
    %206 = vmatpush1.bf16.msra.mxu0 %v182
    %207 = vmatprep.subr.bf16.mxu0 %v185
    %208 = vmatpush1.bf16.msra.mxu0 %v184
    %209 = vmatprep.subr.bf16.mxu0 %v187
    %210 = vmatpush1.bf16.msra.mxu0 %v186
    %211 = vmatprep.subr.bf16.mxu0 %v189
    %212 = vmatpush1.bf16.msra.mxu0 %v188
    %213 = vmatprep.subr.bf16.mxu0 %v191
    %214 = vmatpush1.bf16.msra.mxu0 %v190
    %215 = vmatprep.subr.bf16.mxu0 0
    %216 = vmatpush1.bf16.msra.mxu0 0
    %217 = vmatprep.subr.bf16.mxu0 0
    %218 = vmatpush1.bf16.msra.mxu0 0
    %219 = vmatprep.subr.bf16.mxu0 0
    %220 = vmatpush1.bf16.msra.mxu0 0
    %221 = vmatprep.subr.bf16.mxu0 0
    %222 = vmatpush1.bf16.msra.mxu0 0
    %223 = vmatprep.subr.bf16.mxu0 0
    %224 = vmatpush1.bf16.msra.mxu0 0
    %225 = vmatprep.subr.bf16.mxu0 0
    %226 = vmatpush1.bf16.msra.mxu0 0
    %227 = vmatprep.subr.bf16.mxu0 0
    %228 = vmatpush1.bf16.msra.mxu0 0
    %229 = vmatprep.subr.bf16.mxu0 0
    %230 = vmatpush1.bf16.msra.mxu0 0
    %231 = vmatprep.subr.bf16.mxu0 0
    %232 = vmatpush1.bf16.msra.mxu0 0
    %233 = vmatprep.subr.bf16.mxu0 0
    %234 = vmatpush1.bf16.msra.mxu0 0
    %235 = vmatprep.subr.bf16.mxu0 0
    %236 = vmatpush1.bf16.msra.mxu0 0
    %237 = vmatprep.mubr.bf16.mxu0 0
    %238 = vmatmul.mubr.bf16.gmra.mrb[0].mxu0 %v203
    %v239 = vpop.f32.mrb[0].mxu0
    %v240 = vadd.f32 0.0, %v239
    %v241 = vpop.f32.mrb[0].mxu0
    %v242 = vadd.f32 0.0, %v241
    %v243 = vpop.f32.mrb[0].mxu0
    %v244 = vpop.f32.mrb[0].mxu0
    %245 = vdwg.mxu0
    %v246 = vld [vmem:[%s3] sm:$0xf]
    %v247 = vld [vmem:[%s3 + $0x4] sm:$0xf]
    %v248 = vld [vmem:[%s3 + $0x8] sm:$0xf]
    %v249 = vld [vmem:[%s3 + $0xc] sm:$0xf]
    %v250 = vld [vmem:[%s3 + $0x10] sm:$0xf]
    %v251 = vld [vmem:[%s3 + $0x14] sm:$0xf]
    %v252 = vld [vmem:[%s3 + $0x18] sm:$0xf]
    %v253 = vld [vmem:[%s3 + $0x1c] sm:$0xf]
    %v254 = vld [vmem:[%s3 + $0x20] sm:$0xf]
    %v255 = vld [vmem:[%s3 + $0x24] sm:$0xf]
    %v266 = vunpack.c.l.b16 %v246
    %v267 = vunpack.c.l.b16 %v247
    %v268 = vunpack.c.l.b16 %v248
    %v269 = vunpack.c.l.b16 %v249
    %v270 = vunpack.c.l.b16 %v250
    %v271 = vunpack.c.l.b16 %v251
    %v272 = vunpack.c.l.b16 %v252
    %v273 = vunpack.c.l.b16 %v253
    %v274 = vunpack.c.l.b16 %v254
    %v275 = vunpack.c.l.b16 %v255
    %v276 = vpack.c.b16 %v267, %v266
    %v277 = vpack.c.b16 %v269, %v268
    %v278 = vpack.c.b16 %v271, %v270
    %v279 = vpack.c.b16 %v273, %v272
    %v280 = vpack.c.b16 %v275, %v274
    %286 = vmatprep.subr.bf16.mxu0 0
    %287 = vmatpush1.bf16.msra.mxu0 %v276
    %288 = vmatprep.subr.bf16.mxu0 0
    %289 = vmatpush1.bf16.msra.mxu0 %v277
    %290 = vmatprep.subr.bf16.mxu0 0
    %291 = vmatpush1.bf16.msra.mxu0 %v278
    %292 = vmatprep.subr.bf16.mxu0 0
    %293 = vmatpush1.bf16.msra.mxu0 %v279
    %294 = vmatprep.subr.bf16.mxu0 0
    %295 = vmatpush1.bf16.msra.mxu0 %v280
    %296 = vmatprep.subr.bf16.mxu0 0
    %297 = vmatpush1.bf16.msra.mxu0 0
    %298 = vmatprep.subr.bf16.mxu0 0
    %299 = vmatpush1.bf16.msra.mxu0 0
    %300 = vmatprep.subr.bf16.mxu0 0
    %301 = vmatpush1.bf16.msra.mxu0 0
    %302 = vmatprep.subr.bf16.mxu0 0
    %303 = vmatpush1.bf16.msra.mxu0 0
    %304 = vmatprep.subr.bf16.mxu0 0
    %305 = vmatpush1.bf16.msra.mxu0 0
    %306 = vmatprep.subr.bf16.mxu0 0
    %307 = vmatpush1.bf16.msra.mxu0 0
    %308 = vmatprep.subr.bf16.mxu0 0
    %309 = vmatpush1.bf16.msra.mxu0 0
    %310 = vmatprep.subr.bf16.mxu0 0
    %311 = vmatpush1.bf16.msra.mxu0 0
    %312 = vmatprep.subr.bf16.mxu0 0
    %313 = vmatpush1.bf16.msra.mxu0 0
    %314 = vmatprep.subr.bf16.mxu0 0
    %315 = vmatpush1.bf16.msra.mxu0 0
    %316 = vmatprep.subr.bf16.mxu0 0
    %317 = vmatpush1.bf16.msra.mxu0 0
    %318 = vmatprep.mubr.bf16.mxu0 0
    %319 = vmatmul.mubr.bf16.gmra.mrb[0].mxu0 %v203
    %v320 = vpop.f32.mrb[0].mxu0
    %v321 = vadd.f32 0.0, %v320
    %v322 = vpop.f32.mrb[0].mxu0
    %v323 = vpop.f32.mrb[0].mxu0
    %v324 = vpop.f32.mrb[0].mxu0
    %325 = vdwg.mxu0
    %vm326 = vcmp.eq.f32.partialorder %v240, 0.0
    %vm327 = vcmp.eq.f32.partialorder %v242, 0.0
    %v328 = vsel %vm326, 0.0, %v138
    %v329 = vsel %vm327, 0.0, %v140
    %v332 = vcombine.low %v328, %v329
    %v333 = vcombine.high %v328, %v329
    %v335 = vunpack.c.l.s4 1983009808
    %v336 = vunpack.c.0.s8 %v335
    %v337 = vlaneseq
    %v338 = vshrl.u32 %v337, 7
    %v339 = vsub.s32 %v336, %v338
    %v340 = vrot.slane %v332, %v339
    %v342 = vunpack.c.l.s4 1983009808
    %v343 = vunpack.c.0.s8 %v342
    %v344 = vlaneseq
    %v345 = vshrl.u32 %v344, 7
    %v346 = vsub.s32 %v343, %v345
    %v347 = vrot.slane %v333, %v346
    %v348 = vcombine.high %v340, %v340
    %v349 = vcombine.high %v347, %v347
    %354 = vst [vmem:[#allocation2] sm:$0xf] %v340
    %355 = vst [vmem:[#allocation2 + $0x4] sm:$0xf] %v348
    %356 = vst [vmem:[#allocation2 + $0x8] sm:$0xf] %v347
    %357 = vst [vmem:[#allocation2 + $0xc] sm:$0xf] %v349
    %vm358 = vcmp.eq.f32.partialorder %v321, 0.0
    %v359 = vsel %vm358, 1, 0
    %v360 = vcvt.s32.f32 %v359
    %vm361 = vcmask 64512
    %362 = vst.msk [vmem:[#allocation3] sm:$0xff] %vm361, %v360
    %v363 = vld [vmem:[%s5] sm:$0xff]
    %v364 = vld [vmem:[%s5 + $0x8] sm:$0xff]
    %v365 = vld [vmem:[%s5 + $0x10] sm:$0xff]
    %v366 = vld [vmem:[%s5 + $0x18] sm:$0xff]
    %v367 = vld [vmem:[%s5 + $0x20] sm:$0xff]
    %v368 = vld [vmem:[%s5 + $0x28] sm:$0xff]
    %v369 = vld [vmem:[%s5 + $0x30] sm:$0xff]
    %v370 = vld [vmem:[%s5 + $0x38] sm:$0xff]
    %v371 = vld [vmem:[%s5 + $0x40] sm:$0xff]
    %v372 = vld [vmem:[%s5 + $0x48] sm:$0xff]
    %v373 = vld [vmem:[%s6] sm:$0x1]
    %v375 = vlaneseq
    %v376 = vshrl.u32 %v375, 7
    %v377 = vsub.s32 0, %v376
    %v378 = vrot.slane %v373, %v377
    %380 = vmatprep.subr.mxu0 0.0
    %381 = vmatpush1.msra.mxu0 %v363
    %382 = vmatprep.subr.mxu0 0.0
    %383 = vmatpush1.msra.mxu0 %v364
    %384 = vmatprep.subr.mxu0 0.0
    %385 = vmatpush1.msra.mxu0 %v365
    %386 = vmatprep.subr.mxu0 0.0
    %387 = vmatpush1.msra.mxu0 %v366
    %388 = vmatprep.subr.mxu0 0.0
    %389 = vmatpush1.msra.mxu0 %v367
    %390 = vmatprep.subr.mxu0 0.0
    %391 = vmatpush1.msra.mxu0 %v368
    %392 = vmatprep.subr.mxu0 0.0
    %393 = vmatpush1.msra.mxu0 %v369
    %394 = vmatprep.subr.mxu0 0.0
    %395 = vmatpush1.msra.mxu0 %v370
    %396 = vmatprep.subr.mxu0 0.0
    %397 = vmatpush1.msra.mxu0 %v371
    %398 = vmatprep.subr.mxu0 0.0
    %399 = vmatpush1.msra.mxu0 %v372
    %400 = vmatprep.subr.mxu0 0.0
    %401 = vmatpush1.msra.mxu0 0.0
    %402 = vmatprep.subr.mxu0 0.0
    %403 = vmatpush1.msra.mxu0 0.0
    %404 = vmatprep.subr.mxu0 0.0
    %405 = vmatpush1.msra.mxu0 0.0
    %406 = vmatprep.subr.mxu0 0.0
    %407 = vmatpush1.msra.mxu0 0.0
    %408 = vmatprep.subr.mxu0 0.0
    %409 = vmatpush1.msra.mxu0 0.0
    %410 = vmatprep.subr.mxu0 0.0
    %411 = vmatpush1.msra.mxu0 0.0
    %412 = vmatprep.subr.mxu0 0.0
    %413 = vmatpush1.msra.mxu0 0.0
    %414 = vmatprep.subr.mxu0 0.0
    %415 = vmatpush1.msra.mxu0 0.0
    %416 = vmatprep.subr.mxu0 0.0
    %417 = vmatpush1.msra.mxu0 0.0
    %418 = vmatprep.subr.mxu0 0.0
    %419 = vmatpush1.msra.mxu0 0.0
    %420 = vmatprep.subr.mxu0 0.0
    %421 = vmatpush1.msra.mxu0 0.0
    %422 = vmatprep.subr.mxu0 0.0
    %423 = vmatpush1.msra.mxu0 0.0
    %424 = vmatprep.subr.mxu0 0.0
    %425 = vmatpush1.msra.mxu0 0.0
    %426 = vmatprep.subr.mxu0 0.0
    %427 = vmatpush1.msra.mxu0 0.0
    %428 = vmatprep.subr.mxu0 0.0
    %429 = vmatpush1.msra.mxu0 0.0
    %430 = vmatprep.subr.mxu0 0.0
    %431 = vmatpush1.msra.mxu0 0.0
    %432 = vmatprep.subr.mxu0 0.0
    %433 = vmatpush1.msra.mxu0 0.0
    %434 = vmatprep.subr.mxu0 0.0
    %435 = vmatpush1.msra.mxu0 0.0
    %436 = vmatprep.subr.mxu0 0.0
    %437 = vmatpush1.msra.mxu0 0.0
    %438 = vmatprep.subr.mxu0 0.0
    %439 = vmatpush1.msra.mxu0 0.0
    %440 = vmatprep.subr.mxu0 0.0
    %441 = vmatpush1.msra.mxu0 0.0
    %442 = vmatprep.subr.mxu0 0.0
    %443 = vmatpush1.msra.mxu0 0.0
    %444 = vmatprep.mubr.f32.mxu0 0.0
    %445 = vmatmul.mubr.f32.gmra.mrb[0].mxu0 %v69
    %v446 = vpop.f32.mrb[0].mxu0
    %v447 = vadd.f32 %v378, %v446
    %v448 = vpop.f32.mrb[0].mxu0
    %449 = vdwg.mxu0
    %vm450 = vcmask 457728
    %451 = vst.msk [vmem:[#allocation4] sm:$0xff] %vm450, %v447
    // Predicated region
    $region30: #{_lambda_.1} parent=1 // pred_check
      _
    $region31: #{_lambda_.1} parent=1 // pred_check_branch
      %453 = sbr.rel (0) target = $region33
    $region32: #{_lambda_.1} parent=1 // pred_region
      // Predicated region
      $region34: #{_lambda_.1} parent=32 // pred_check
        _
      $region35: #{_lambda_.1} parent=32 // pred_check_branch
        %455 = sbr.rel (0) target = $region37
      $region36: #{_lambda_.1} parent=32 // pred_region
        // Predicated region
        $region38: #{_lambda_.1} parent=36 // pred_check
          _
        $region39: #{_lambda_.1} parent=36 // pred_check_branch
          %457 = sbr.rel target = $region41
        $region40: #{_lambda_.1} parent=36 // pred_region
          // Predicated region
          $region53: #{_lambda_.1} parent=40 // pred_check
            _
          $region54: #{_lambda_.1} parent=40 // pred_check_branch
            %472 = sbr.rel (0) target = $region56
          $region55: #{_lambda_.1} parent=40 // pred_region
            loop: start=0, step=1, limit=1
            $region57: #{_lambda_.1} parent=55 // loop_pre_header
              _
            $region58: #{_lambda_.1} parent=55 // loop_header
              %s475 = sphi 0, %s479
              %p476 = scmp.ge.s32.totalorder %s475, 1
              %s480 = sphi [#allocation2], [#allocation2]
              %s481 = sphi %s7, %s7
            $region59: #{_lambda_.1} parent=55 // loop_header_branch
              %478 = sbr.rel (%p476) target = $region63
            $region60: #{_lambda_.1} parent=55 // loop_body
              %v482 = vld [vmem:[%s480] sm:$0xf]
              %483 = vst [vmem:[%s481] sm:$0xf] %v482
            $region61: #{_lambda_.1} parent=55 // loop_footer
              %s479 = sadd.s32 1, %s475
            $region62: #{_lambda_.1} parent=55 // loop_footer_branch
              %474 = sbr.rel target = $region58
            $region63: #{_lambda_.1} parent=55 // loop_exit
              _
          $region56: #{_lambda_.1} parent=40 // pred_fallthru
            _
        $region41: #{_lambda_.1} parent=36 // pred_fallthru
          _
        // Predicated region
        $region42: #{_lambda_.1} parent=36 // pred_check
          _
        $region43: #{_lambda_.1} parent=36 // pred_check_branch
          %459 = sbr.rel (0) target = $region45
        $region44: #{_lambda_.1} parent=36 // pred_region
          loop: start=0, step=1, limit=1
          $region46: #{_lambda_.1} parent=44 // loop_pre_header
            _
          $region47: #{_lambda_.1} parent=44 // loop_header
            %s462 = sphi 0, %s466
            %p463 = scmp.ge.s32.totalorder %s462, 1
            %s467 = sphi [#allocation2], [#allocation2]
            %s468 = sphi %s7, %s7
          $region48: #{_lambda_.1} parent=44 // loop_header_branch
            %465 = sbr.rel (%p463) target = $region52
          $region49: #{_lambda_.1} parent=44 // loop_body
            %v469 = vld [vmem:[%s467] sm:$0xf]
            %470 = vst [vmem:[%s468] sm:$0xf] %v469
          $region50: #{_lambda_.1} parent=44 // loop_footer
            %s466 = sadd.s32 1, %s462
          $region51: #{_lambda_.1} parent=44 // loop_footer_branch
            %461 = sbr.rel target = $region47
          $region52: #{_lambda_.1} parent=44 // loop_exit
            _
        $region45: #{_lambda_.1} parent=36 // pred_fallthru
          _
      $region37: #{_lambda_.1} parent=32 // pred_fallthru
        _
      %484 = vnop
    $region33: #{_lambda_.1} parent=1 // pred_fallthru
      _
    // Predicated region
    $region64: #{_lambda_.1} parent=1 // pred_check
      _
    $region65: #{_lambda_.1} parent=1 // pred_check_branch
      %486 = sbr.rel (0) target = $region67
    $region66: #{_lambda_.1} parent=1 // pred_region
      // Predicated region
      $region68: #{_lambda_.1} parent=66 // pred_check
        _
      $region69: #{_lambda_.1} parent=66 // pred_check_branch
        %488 = sbr.rel (0) target = $region71
      $region70: #{_lambda_.1} parent=66 // pred_region
        // Predicated region
        $region72: #{_lambda_.1} parent=70 // pred_check
          _
        $region73: #{_lambda_.1} parent=70 // pred_check_branch
          %490 = sbr.rel target = $region75
        $region74: #{_lambda_.1} parent=70 // pred_region
          // Predicated region
          $region87: #{_lambda_.1} parent=74 // pred_check
            _
          $region88: #{_lambda_.1} parent=74 // pred_check_branch
            %505 = sbr.rel (0) target = $region90
          $region89: #{_lambda_.1} parent=74 // pred_region
            loop: start=0, step=1, limit=1
            $region91: #{_lambda_.1} parent=89 // loop_pre_header
              _
            $region92: #{_lambda_.1} parent=89 // loop_header
              %s508 = sphi 0, %s512
              %p509 = scmp.ge.s32.totalorder %s508, 1
              %s513 = sphi [#allocation3], [#allocation3]
              %s514 = sphi %s8, %s8
            $region93: #{_lambda_.1} parent=89 // loop_header_branch
              %511 = sbr.rel (%p509) target = $region97
            $region94: #{_lambda_.1} parent=89 // loop_body
              %v515 = vld [vmem:[%s513] sm:$0x3]
              %516 = vst [vmem:[%s514] sm:$0x3] %v515
            $region95: #{_lambda_.1} parent=89 // loop_footer
              %s512 = sadd.s32 1, %s508
            $region96: #{_lambda_.1} parent=89 // loop_footer_branch
              %507 = sbr.rel target = $region92
            $region97: #{_lambda_.1} parent=89 // loop_exit
              _
          $region90: #{_lambda_.1} parent=74 // pred_fallthru
            _
        $region75: #{_lambda_.1} parent=70 // pred_fallthru
          _
        // Predicated region
        $region76: #{_lambda_.1} parent=70 // pred_check
          _
        $region77: #{_lambda_.1} parent=70 // pred_check_branch
          %492 = sbr.rel (0) target = $region79
        $region78: #{_lambda_.1} parent=70 // pred_region
          loop: start=0, step=1, limit=1
          $region80: #{_lambda_.1} parent=78 // loop_pre_header
            _
          $region81: #{_lambda_.1} parent=78 // loop_header
            %s495 = sphi 0, %s499
            %p496 = scmp.ge.s32.totalorder %s495, 1
            %s500 = sphi [#allocation3], [#allocation3]
            %s501 = sphi %s8, %s8
          $region82: #{_lambda_.1} parent=78 // loop_header_branch
            %498 = sbr.rel (%p496) target = $region86
          $region83: #{_lambda_.1} parent=78 // loop_body
            %v502 = vld [vmem:[%s500] sm:$0x3]
            %503 = vst [vmem:[%s501] sm:$0x3] %v502
          $region84: #{_lambda_.1} parent=78 // loop_footer
            %s499 = sadd.s32 1, %s495
          $region85: #{_lambda_.1} parent=78 // loop_footer_branch
            %494 = sbr.rel target = $region81
          $region86: #{_lambda_.1} parent=78 // loop_exit
            _
        $region79: #{_lambda_.1} parent=70 // pred_fallthru
          _
      $region71: #{_lambda_.1} parent=66 // pred_fallthru
        _
      %517 = vnop
    $region67: #{_lambda_.1} parent=1 // pred_fallthru
      _
    // Predicated region
    $region98: #{_lambda_.1} parent=1 // pred_check
      _
    $region99: #{_lambda_.1} parent=1 // pred_check_branch
      %519 = sbr.rel (0) target = $region101
    $region100: #{_lambda_.1} parent=1 // pred_region
      // Predicated region
      $region102: #{_lambda_.1} parent=100 // pred_check
        _
      $region103: #{_lambda_.1} parent=100 // pred_check_branch
        %521 = sbr.rel (0) target = $region105
      $region104: #{_lambda_.1} parent=100 // pred_region
        // Predicated region
        $region106: #{_lambda_.1} parent=104 // pred_check
          _
        $region107: #{_lambda_.1} parent=104 // pred_check_branch
          %523 = sbr.rel target = $region109
        $region108: #{_lambda_.1} parent=104 // pred_region
          // Predicated region
          $region121: #{_lambda_.1} parent=108 // pred_check
            _
          $region122: #{_lambda_.1} parent=108 // pred_check_branch
            %538 = sbr.rel (0) target = $region124
          $region123: #{_lambda_.1} parent=108 // pred_region
            loop: start=0, step=1, limit=1
            $region125: #{_lambda_.1} parent=123 // loop_pre_header
              _
            $region126: #{_lambda_.1} parent=123 // loop_header
              %s541 = sphi 0, %s545
              %p542 = scmp.ge.s32.totalorder %s541, 1
              %s546 = sphi [#allocation4], [#allocation4]
              %s547 = sphi %s9, %s9
            $region127: #{_lambda_.1} parent=123 // loop_header_branch
              %544 = sbr.rel (%p542) target = $region131
            $region128: #{_lambda_.1} parent=123 // loop_body
              %v548 = vld [vmem:[%s546] sm:$0x3]
              %549 = vst [vmem:[%s547] sm:$0x3] %v548
            $region129: #{_lambda_.1} parent=123 // loop_footer
              %s545 = sadd.s32 1, %s541
            $region130: #{_lambda_.1} parent=123 // loop_footer_branch
              %540 = sbr.rel target = $region126
            $region131: #{_lambda_.1} parent=123 // loop_exit
              _
          $region124: #{_lambda_.1} parent=108 // pred_fallthru
            _
        $region109: #{_lambda_.1} parent=104 // pred_fallthru
          _
        // Predicated region
        $region110: #{_lambda_.1} parent=104 // pred_check
          _
        $region111: #{_lambda_.1} parent=104 // pred_check_branch
          %525 = sbr.rel (0) target = $region113
        $region112: #{_lambda_.1} parent=104 // pred_region
          loop: start=0, step=1, limit=1
          $region114: #{_lambda_.1} parent=112 // loop_pre_header
            _
          $region115: #{_lambda_.1} parent=112 // loop_header
            %s528 = sphi 0, %s532
            %p529 = scmp.ge.s32.totalorder %s528, 1
            %s533 = sphi [#allocation4], [#allocation4]
            %s534 = sphi %s9, %s9
          $region116: #{_lambda_.1} parent=112 // loop_header_branch
            %531 = sbr.rel (%p529) target = $region120
          $region117: #{_lambda_.1} parent=112 // loop_body
            %v535 = vld [vmem:[%s533] sm:$0x3]
            %536 = vst [vmem:[%s534] sm:$0x3] %v535
          $region118: #{_lambda_.1} parent=112 // loop_footer
            %s532 = sadd.s32 1, %s528
          $region119: #{_lambda_.1} parent=112 // loop_footer_branch
            %527 = sbr.rel target = $region115
          $region120: #{_lambda_.1} parent=112 // loop_exit
            _
        $region113: #{_lambda_.1} parent=104 // pred_fallthru
          _
      $region105: #{_lambda_.1} parent=100 // pred_fallthru
        _
      %550 = vnop
    $region101: #{_lambda_.1} parent=1 // pred_fallthru
      _
    // Predicated region
    $region132: #{_lambda_.1} parent=1 // pred_check
      _
    $region133: #{_lambda_.1} parent=1 // pred_check_branch
      %552 = sbr.rel (0) target = $region135
    $region134: #{_lambda_.1} parent=1 // pred_region
      _
    $region135: #{_lambda_.1} parent=1 // pred_fallthru
      _
    // Predicated region
    $region136: #{_lambda_.1} parent=1 // pred_check
      _
    $region137: #{_lambda_.1} parent=1 // pred_check_branch
      %554 = sbr.rel (0) target = $region139
    $region138: #{_lambda_.1} parent=1 // pred_region
      _
    $region139: #{_lambda_.1} parent=1 // pred_fallthru
      _
    // Predicated region
    $region140: #{_lambda_.1} parent=1 // pred_check
      _
    $region141: #{_lambda_.1} parent=1 // pred_check_branch
      %556 = sbr.rel (0) target = $region143
    $region142: #{_lambda_.1} parent=1 // pred_region
      _
    $region143: #{_lambda_.1} parent=1 // pred_fallthru
      _

</llo_original>
